<compile_context>
chip_gen: v5e
topology: v5e:2x2
jax: 0.10.0
libtpu: 0.0.40
codegen_flags: <defaults>
</compile_context>

<pallas_src>
import functools

import jax
import jax.numpy as jnp
from jax import lax
from jax.experimental import pallas as pl
from jax.experimental.pallas import tpu as pltpu


def _mlp_kernel(n_layers, x_ref, *refs):
    """refs = (w0_ref, b0_ref, w1_ref, b1_ref, ..., w_last_ref, b_last_ref, out_ref).

    x_ref:    (in_dim, TM)            -- one lane-dense batch tile (batch on lanes)
    w_0:      (h0, in_dim)            -- PyTorch layout, resident across grid steps
    w_i:      (h_i, h_{i-1})          -- hidden layers, PyTorch layout (MXU)
    w_last:   (h_{L-1}, out_dim)      -- stored transposed (see prepare_params)
    b_i:      (out_i, 1)
    out_ref:  (out_dim, TM)           -- lane-dense output
    """
    out_ref = refs[-1]
    x = x_ref[...]                                   # (in_dim, TM)
    in_dim = x.shape[0]

    # --- Layer 0: K = in_dim is tiny (2) -> rank-1 VPU FMAs instead of an MXU fill/drain.
    w0 = refs[0][...]                                # (h0, in_dim)
    b0 = refs[1][...]                                # (h0, 1)
    z = w0[:, 0:1] * x[0:1, :] + b0                  # (h0, TM)
    for k in range(1, in_dim):
        z = z + w0[:, k:k + 1] * x[k:k + 1, :]
    a = jnp.tanh(z)

    # --- Hidden layers 1 .. n_layers-2: well-shaped square matmuls stay on the MXU.
    for i in range(1, n_layers - 1):
        w = refs[2 * i][...]                         # (h_i, h_{i-1})
        b = refs[2 * i + 1][...]                     # (h_i, 1)
        a = jnp.tanh(jnp.dot(w, a, preferred_element_type=jnp.float32) + b)

    # --- Final layer (linear, no activation). Weight is stored (in_last, out_dim).
    w_l = refs[2 * (n_layers - 1)][...]              # (h_{L-1}, out_dim)
    b_l = refs[2 * (n_layers - 1) + 1][...]          # (out_dim, 1)
    if w_l.shape[1] == 1:
        # M == 1 head: VPU multiply + sublane (XLU) reduction, no MXU pass.
        z = jnp.sum(w_l * a, axis=0, keepdims=True) + b_l
    else:
        z = lax.dot_general(w_l, a, (((0,), (0,)), ((), ())),
                            preferred_element_type=jnp.float32) + b_l

    out_ref[...] = z.astype(out_ref.dtype)


def prepare_params(params):
    """One-time parameter prep (hoisted out of the per-call path).

    Keeps W in PyTorch (out, in) layout for the first/hidden layers, transposes the LAST
    layer's weight to (in, out) so the head can run as a VPU reduce, and reshapes every
    bias to (out, 1) for lane broadcast.
    """
    n = len(params)
    prepared = []
    for idx, (W, b) in enumerate(params):
        W = jnp.asarray(W, jnp.float32)
        b = jnp.asarray(b, jnp.float32).reshape(-1, 1)
        if idx == n - 1:
            W = W.T                                   # (in_last, out_dim)
        prepared.append((W, b))
    return prepared


def net_forward(x, prepared_params, *, tm=2048):
    """Fused forward pass.

    x:               (N, in_dim) float32
    prepared_params: output of prepare_params
    tm:              batch tile (lane width); rounded to a multiple of 128 and clamped
                     so it never exceeds the (128-rounded) batch size.
    Returns (N, out_dim) float32, matching the PyTorch module's forward.
    """
    n_layers = len(prepared_params)
    assert n_layers >= 2, "Net needs at least two linear layers"
    N, in_dim = x.shape
    out_dim = prepared_params[-1][0].shape[1]        # last W stored (in_last, out_dim)

    # Tile sizing: multiple of 128, never larger than the padded batch (avoids the
    # demo-scale "64x redundant compute" problem and keeps grid >= 2 for big batches).
    tm = pl.cdiv(tm, 128) * 128
    tm = max(128, min(tm, pl.cdiv(N, 128) * 128))
    n_pad = pl.cdiv(N, tm) * tm

    # Lane-dense input: (in_dim, N_pad). The one-time transpose of an (N, 2) array is
    # negligible; it removes a per-step XLU transpose and fills all 128 lanes.
    x_t = x.T
    if n_pad != N:
        x_t = jnp.pad(x_t, ((0, 0), (0, n_pad - N)))

    flat_args = [x_t]
    in_specs = [pl.BlockSpec((in_dim, tm), lambda i: (0, i))]
    for W, b in prepared_params:
        flat_args.append(W)
        flat_args.append(b)
        # Full-extent blocks + constant index_map -> weights stay resident in VMEM.
        in_specs.append(pl.BlockSpec(W.shape, lambda i: (0, 0)))
        in_specs.append(pl.BlockSpec(b.shape, lambda i: (0, 0)))

    out_spec = pl.BlockSpec((out_dim, tm), lambda i: (0, i))

    kernel = functools.partial(_mlp_kernel, n_layers)
    out_t = pl.pallas_call(
        kernel,
        out_shape=jax.ShapeDtypeStruct((out_dim, n_pad), jnp.float32),
        grid=(n_pad // tm,),
        in_specs=in_specs,
        out_specs=out_spec,
        compiler_params=pltpu.CompilerParams(
            dimension_semantics=("parallel",)),
    )(*flat_args)

    # Back to the PyTorch (N, out_dim) convention (cheap when out_dim == 1).
    return out_t[:, :N].T


def init_params(key, layers):
    """Xavier-normal weights (gain=1.0) and zero biases, matching
    nn.init.xavier_normal_ / nn.init.zeros_ in the PyTorch module."""
    params = []
    for i in range(len(layers) - 1):
        fan_in, fan_out = layers[i], layers[i + 1]
        key, sub = jax.random.split(key)
        std = (2.0 / (fan_in + fan_out)) ** 0.5
        W = std * jax.random.normal(sub, (fan_out, fan_in), dtype=jnp.float32)
        b = jnp.zeros((fan_out,), dtype=jnp.float32)
        params.append((W, b))
    return params


def net_forward_ref(x, params):
    """Pure-JAX reference implementing the PyTorch forward exactly (raw (out,in) params)."""
    a = jnp.tanh(x @ params[0][0].T + params[0][1])
    for W, b in params[1:-1]:
        a = jnp.tanh(a @ W.T + b)
    return a @ params[-1][0].T + params[-1][1]


if __name__ == "__main__":
    # Helmholtz PINN-style architecture: 2 inputs (x, y) -> three hidden(32) -> 1 output.
    layers = [2, 32, 32, 32, 1]
    batch = 256  # small deterministic demo batch (multiple of 128 -> no padding waste)

    key = jax.random.PRNGKey(0)
    k_x, k_p = jax.random.split(key)
    x = jax.random.uniform(k_x, (batch, layers[0]), dtype=jnp.float32,
                           minval=-1.0, maxval=1.0)
    params = init_params(k_p, layers)
    prepared = prepare_params(params)   # hoisted one-time parameter prep

    out = net_forward(x, prepared)               # tm auto-clamps to 256 -> 1 grid step
    out_tiled = net_forward(x, prepared, tm=128)  # exercises the multi-step grid path
    jax.block_until_ready((out, out_tiled))

    ref = net_forward_ref(x, params)
    assert out.shape == (batch, layers[-1])
    assert jnp.allclose(out, ref, atol=1e-5, rtol=1e-5), "mismatch vs JAX reference"
    assert jnp.allclose(out_tiled, ref, atol=1e-5, rtol=1e-5), "tiled mismatch vs reference"

    print("KERNEL_OK")
</pallas_src>

<mosaic_0001>
module attributes {stable_mosaic.version = 11 : i64} {
  func.func @_mlp_kernel(%arg0: i32, %arg1: memref<2x256xf32, #tpu.memory_space<vmem>>, %arg2: memref<32x2xf32, #tpu.memory_space<vmem>>, %arg3: memref<32x1xf32, #tpu.memory_space<vmem>>, %arg4: memref<32x32xf32, #tpu.memory_space<vmem>>, %arg5: memref<32x1xf32, #tpu.memory_space<vmem>>, %arg6: memref<32x32xf32, #tpu.memory_space<vmem>>, %arg7: memref<32x1xf32, #tpu.memory_space<vmem>>, %arg8: memref<32x1xf32, #tpu.memory_space<vmem>>, %arg9: memref<1x1xf32, #tpu.memory_space<vmem>>, %arg10: memref<1x256xf32, #tpu.memory_space<vmem>>) attributes {dimension_semantics = [#tpu.dimension_semantics<parallel>], iteration_bounds = array<i64: 1>, scalar_prefetch = 0 : i64, scratch_operands = 0 : i64, tpu.core_type = #tpu.core_type<tc>, window_params = [{transform_indices = @transform_0, window_bounds = array<i64: 2, 256>}, {pipeline_mode = #tpu.pipeline_mode<synchronous>, transform_indices = @transform_1, window_bounds = array<i64: 32, 2>}, {pipeline_mode = #tpu.pipeline_mode<synchronous>, transform_indices = @transform_2, window_bounds = array<i64: 32, 1>}, {pipeline_mode = #tpu.pipeline_mode<synchronous>, transform_indices = @transform_3, window_bounds = array<i64: 32, 32>}, {pipeline_mode = #tpu.pipeline_mode<synchronous>, transform_indices = @transform_4, window_bounds = array<i64: 32, 1>}, {pipeline_mode = #tpu.pipeline_mode<synchronous>, transform_indices = @transform_5, window_bounds = array<i64: 32, 32>}, {pipeline_mode = #tpu.pipeline_mode<synchronous>, transform_indices = @transform_6, window_bounds = array<i64: 32, 1>}, {pipeline_mode = #tpu.pipeline_mode<synchronous>, transform_indices = @transform_7, window_bounds = array<i64: 32, 1>}, {pipeline_mode = #tpu.pipeline_mode<synchronous>, transform_indices = @transform_8, window_bounds = array<i64: 1, 1>}, {transform_indices = @transform_9, window_bounds = array<i64: 1, 256>}]} {
    %c0 = arith.constant 0 : index
    %c0_0 = arith.constant 0 : index
    %0 = vector.load %arg1[%c0, %c0_0] : memref<2x256xf32, #tpu.memory_space<vmem>>, vector<2x256xf32>
    %c0_1 = arith.constant 0 : index
    %c0_2 = arith.constant 0 : index
    %1 = vector.load %arg2[%c0_1, %c0_2] : memref<32x2xf32, #tpu.memory_space<vmem>>, vector<32x2xf32>
    %c0_3 = arith.constant 0 : index
    %c0_4 = arith.constant 0 : index
    %2 = vector.load %arg3[%c0_3, %c0_4] : memref<32x1xf32, #tpu.memory_space<vmem>>, vector<32x1xf32>
    %3 = vector.extract_strided_slice %1 {offsets = [0, 0], sizes = [32, 1], strides = [1, 1]} : vector<32x2xf32> to vector<32x1xf32>
    %4 = vector.extract_strided_slice %0 {offsets = [0, 0], sizes = [1, 256], strides = [1, 1]} : vector<2x256xf32> to vector<1x256xf32>
    %5 = vector.broadcast %3 : vector<32x1xf32> to vector<32x256xf32>
    %6 = vector.broadcast %4 : vector<1x256xf32> to vector<32x256xf32>
    %7 = arith.mulf %5, %6 : vector<32x256xf32>
    %8 = vector.broadcast %2 : vector<32x1xf32> to vector<32x256xf32>
    %9 = arith.addf %7, %8 : vector<32x256xf32>
    %10 = vector.extract_strided_slice %1 {offsets = [0, 1], sizes = [32, 1], strides = [1, 1]} : vector<32x2xf32> to vector<32x1xf32>
    %11 = vector.extract_strided_slice %0 {offsets = [1, 0], sizes = [1, 256], strides = [1, 1]} : vector<2x256xf32> to vector<1x256xf32>
    %12 = vector.broadcast %10 : vector<32x1xf32> to vector<32x256xf32>
    %13 = vector.broadcast %11 : vector<1x256xf32> to vector<32x256xf32>
    %14 = arith.mulf %12, %13 : vector<32x256xf32>
    %15 = arith.addf %9, %14 : vector<32x256xf32>
    %16 = math.tanh %15 : vector<32x256xf32>
    %c0_5 = arith.constant 0 : index
    %c0_6 = arith.constant 0 : index
    %17 = vector.load %arg4[%c0_5, %c0_6] : memref<32x32xf32, #tpu.memory_space<vmem>>, vector<32x32xf32>
    %c0_7 = arith.constant 0 : index
    %c0_8 = arith.constant 0 : index
    %18 = vector.load %arg5[%c0_7, %c0_8] : memref<32x1xf32, #tpu.memory_space<vmem>>, vector<32x1xf32>
    %cst = arith.constant dense<0.000000e+00> : vector<32x256xf32>
    %19 = tpu.matmul %17, %16, %cst {dimension_numbers = #tpu.dot_dimension_numbers<[1], [0], [0], [1], [0, 0, 1, 1], [], []>} : vector<32x32xf32>, vector<32x256xf32>, vector<32x256xf32> -> vector<32x256xf32>
    %20 = vector.broadcast %18 : vector<32x1xf32> to vector<32x256xf32>
    %21 = arith.addf %19, %20 : vector<32x256xf32>
    %22 = math.tanh %21 : vector<32x256xf32>
    %c0_9 = arith.constant 0 : index
    %c0_10 = arith.constant 0 : index
    %23 = vector.load %arg6[%c0_9, %c0_10] : memref<32x32xf32, #tpu.memory_space<vmem>>, vector<32x32xf32>
    %c0_11 = arith.constant 0 : index
    %c0_12 = arith.constant 0 : index
    %24 = vector.load %arg7[%c0_11, %c0_12] : memref<32x1xf32, #tpu.memory_space<vmem>>, vector<32x1xf32>
    %cst_13 = arith.constant dense<0.000000e+00> : vector<32x256xf32>
    %25 = tpu.matmul %23, %22, %cst_13 {dimension_numbers = #tpu.dot_dimension_numbers<[1], [0], [0], [1], [0, 0, 1, 1], [], []>} : vector<32x32xf32>, vector<32x256xf32>, vector<32x256xf32> -> vector<32x256xf32>
    %26 = vector.broadcast %24 : vector<32x1xf32> to vector<32x256xf32>
    %27 = arith.addf %25, %26 : vector<32x256xf32>
    %28 = math.tanh %27 : vector<32x256xf32>
    %c0_14 = arith.constant 0 : index
    %c0_15 = arith.constant 0 : index
    %29 = vector.load %arg8[%c0_14, %c0_15] : memref<32x1xf32, #tpu.memory_space<vmem>>, vector<32x1xf32>
    %c0_16 = arith.constant 0 : index
    %c0_17 = arith.constant 0 : index
    %30 = vector.load %arg9[%c0_16, %c0_17] : memref<1x1xf32, #tpu.memory_space<vmem>>, vector<1x1xf32>
    %31 = vector.broadcast %29 : vector<32x1xf32> to vector<32x256xf32>
    %32 = arith.mulf %31, %28 : vector<32x256xf32>
    %cst_18 = arith.constant dense<0.000000e+00> : vector<256xf32>
    %33 = vector.multi_reduction <add>, %32, %cst_18 [0] : vector<32x256xf32> to vector<256xf32>
    %34 = vector.shape_cast %33 : vector<256xf32> to vector<1x256xf32>
    %35 = vector.broadcast %30 : vector<1x1xf32> to vector<1x256xf32>
    %36 = arith.addf %34, %35 : vector<1x256xf32>
    %c0_19 = arith.constant 0 : index
    %c0_20 = arith.constant 0 : index
    %37 = vector.load %arg10[%c0_19, %c0_20] : memref<1x256xf32, #tpu.memory_space<vmem>>, vector<1x256xf32>
    tpu.vector_store %arg10[%c0_19, %c0_20], %36 {strides = array<i32>} : memref<1x256xf32, #tpu.memory_space<vmem>>, vector<1x256xf32>,
    return
  }
  func.func @transform_0(%arg0: i32) -> (i32, i32) {
    %c0_i32 = arith.constant 0 : i32
    %c0_i32_0 = arith.constant 0 : i32
    return %c0_i32, %arg0 : i32, i32
  }
  func.func @transform_1(%arg0: i32) -> (i32, i32) {
    %c0_i32 = arith.constant 0 : i32
    %c0_i32_0 = arith.constant 0 : i32
    %c0_i32_1 = arith.constant 0 : i32
    return %c0_i32, %c0_i32_0 : i32, i32
  }
  func.func @transform_2(%arg0: i32) -> (i32, i32) {
    %c0_i32 = arith.constant 0 : i32
    %c0_i32_0 = arith.constant 0 : i32
    %c0_i32_1 = arith.constant 0 : i32
    return %c0_i32, %c0_i32_0 : i32, i32
  }
  func.func @transform_3(%arg0: i32) -> (i32, i32) {
    %c0_i32 = arith.constant 0 : i32
    %c0_i32_0 = arith.constant 0 : i32
    %c0_i32_1 = arith.constant 0 : i32
    return %c0_i32, %c0_i32_0 : i32, i32
  }
  func.func @transform_4(%arg0: i32) -> (i32, i32) {
    %c0_i32 = arith.constant 0 : i32
    %c0_i32_0 = arith.constant 0 : i32
    %c0_i32_1 = arith.constant 0 : i32
    return %c0_i32, %c0_i32_0 : i32, i32
  }
  func.func @transform_5(%arg0: i32) -> (i32, i32) {
    %c0_i32 = arith.constant 0 : i32
    %c0_i32_0 = arith.constant 0 : i32
    %c0_i32_1 = arith.constant 0 : i32
    return %c0_i32, %c0_i32_0 : i32, i32
  }
  func.func @transform_6(%arg0: i32) -> (i32, i32) {
    %c0_i32 = arith.constant 0 : i32
    %c0_i32_0 = arith.constant 0 : i32
    %c0_i32_1 = arith.constant 0 : i32
    return %c0_i32, %c0_i32_0 : i32, i32
  }
  func.func @transform_7(%arg0: i32) -> (i32, i32) {
    %c0_i32 = arith.constant 0 : i32
    %c0_i32_0 = arith.constant 0 : i32
    %c0_i32_1 = arith.constant 0 : i32
    return %c0_i32, %c0_i32_0 : i32, i32
  }
  func.func @transform_8(%arg0: i32) -> (i32, i32) {
    %c0_i32 = arith.constant 0 : i32
    %c0_i32_0 = arith.constant 0 : i32
    %c0_i32_1 = arith.constant 0 : i32
    return %c0_i32, %c0_i32_0 : i32, i32
  }
  func.func @transform_9(%arg0: i32) -> (i32, i32) {
    %c0_i32 = arith.constant 0 : i32
    %c0_i32_0 = arith.constant 0 : i32
    return %c0_i32, %arg0 : i32, i32
  }
}

</mosaic_0001>

<llo_original>
// kernel: tpu_custom_call.1
$region0: #{tpu_custom_call.1}
  #allocation0 [shape = 'u32[]', space=smem, size = 0x4, offset = 0x4, fixed_abs, tag = 'smem constant byte address 0x4 - core index']
  #allocation1 [shape = 'u32[72,128]{1,0:T(1,128)}', space=vmem, size = 0x9000, scoped, tag = 'internal scratch']
  #allocation2 [shape = 'f32[1,1]{1,0:T(1,128)S(1)}', space=vmem, size = 0x200, scoped, tag = 'scoped memory for tpu_custom_call.1']
  %s0 = inlined_call_operand.vmem [shape: f32[2,256], index: 0, kind: input, shape index: {}]
  %s1 = inlined_call_operand.vmem [shape: f32[32,2], index: 1, kind: input, shape index: {}]
  %s2 = inlined_call_operand.vmem [shape: f32[32,1], index: 2, kind: input, shape index: {}]
  %s3 = inlined_call_operand.vmem [shape: f32[32,32], index: 3, kind: input, shape index: {}]
  %s4 = inlined_call_operand.vmem [shape: f32[32,1], index: 4, kind: input, shape index: {}]
  %s5 = inlined_call_operand.vmem [shape: f32[32,32], index: 5, kind: input, shape index: {}]
  %s6 = inlined_call_operand.vmem [shape: f32[32,1], index: 6, kind: input, shape index: {}]
  %s7 = inlined_call_operand.vmem [shape: f32[32,1], index: 7, kind: input, shape index: {}]
  %s8 = inlined_call_operand.<no memory space> [shape: f32[1,1], index: 8, kind: input, shape index: {}]
  %s9 = inlined_call_operand.hbm [shape: f32[1,256], index: 9, kind: output, shape index: {}]
  %s10 = sld [smem:[#allocation0]]
  $region46: #{tpu_custom_call.1} parent=0
    _
  %s12 = ssub.s32 1, %s10
  %s13 = scalar_select 0, %s12, %s10
  %v14 = vstv %s8
  %15 = vst [vmem:[#allocation2] sm:$0x1] %v14
  $region1: #{tpu_custom_call.1} parent=0
    #allocation3 [shape = 'u8[1024]{0}', space=vmem, size = 0x400, scoped, tag = 'output window, operand 0, single buffered']
    #allocation4 [shape = 's32[1]{0}', space=sflag, size = 0x4, scoped, tag = 'scoped memory for tpu_custom_call.1']
    %16 = vsyncpa [#allocation4], 0
    // Predicated region
    $region2: #{tpu_custom_call.1} parent=1 // pred_check
      _
    $region3: #{tpu_custom_call.1} parent=1 // pred_check_branch
      %18 = sbr.rel (0) target = $region5
    $region4: #{tpu_custom_call.1} parent=1 // pred_region
      _
    $region5: #{tpu_custom_call.1} parent=1 // pred_fallthru
      _
    // Predicated region
    $region6: #{tpu_custom_call.1} parent=1 // pred_check
      _
    $region7: #{tpu_custom_call.1} parent=1 // pred_check_branch
      %20 = sbr.rel (0) target = $region9
    $region8: #{tpu_custom_call.1} parent=1 // pred_region
      _
    $region9: #{tpu_custom_call.1} parent=1 // pred_fallthru
      _
    // Predicated region
    $region10: #{tpu_custom_call.1} parent=1 // pred_check
      _
    $region11: #{tpu_custom_call.1} parent=1 // pred_check_branch
      %22 = sbr.rel (0) target = $region13
    $region12: #{tpu_custom_call.1} parent=1 // pred_region
      _
    $region13: #{tpu_custom_call.1} parent=1 // pred_fallthru
      _
    // Predicated region
    $region14: #{tpu_custom_call.1} parent=1 // pred_check
      _
    $region15: #{tpu_custom_call.1} parent=1 // pred_check_branch
      %24 = sbr.rel (0) target = $region17
    $region16: #{tpu_custom_call.1} parent=1 // pred_region
      _
    $region17: #{tpu_custom_call.1} parent=1 // pred_fallthru
      _
    // Predicated region
    $region18: #{tpu_custom_call.1} parent=1 // pred_check
      _
    $region19: #{tpu_custom_call.1} parent=1 // pred_check_branch
      %26 = sbr.rel (0) target = $region21
    $region20: #{tpu_custom_call.1} parent=1 // pred_region
      _
    $region21: #{tpu_custom_call.1} parent=1 // pred_fallthru
      _
    // Predicated region
    $region22: #{tpu_custom_call.1} parent=1 // pred_check
      _
    $region23: #{tpu_custom_call.1} parent=1 // pred_check_branch
      %28 = sbr.rel (0) target = $region25
    $region24: #{tpu_custom_call.1} parent=1 // pred_region
      _
    $region25: #{tpu_custom_call.1} parent=1 // pred_fallthru
      _
    // Predicated region
    $region26: #{tpu_custom_call.1} parent=1 // pred_check
      _
    $region27: #{tpu_custom_call.1} parent=1 // pred_check_branch
      %30 = sbr.rel (0) target = $region29
    $region28: #{tpu_custom_call.1} parent=1 // pred_region
      _
    $region29: #{tpu_custom_call.1} parent=1 // pred_fallthru
      _
    // Predicated region
    $region30: #{tpu_custom_call.1} parent=1 // pred_check
      _
    $region31: #{tpu_custom_call.1} parent=1 // pred_check_branch
      %32 = sbr.rel (0) target = $region33
    $region32: #{tpu_custom_call.1} parent=1 // pred_region
      _
    $region33: #{tpu_custom_call.1} parent=1 // pred_fallthru
      _
    // Predicated region
    $region34: #{tpu_custom_call.1} parent=1 // pred_check
      _
    $region35: #{tpu_custom_call.1} parent=1 // pred_check_branch
      %34 = sbr.rel (0) target = $region37
    $region36: #{tpu_custom_call.1} parent=1 // pred_region
      _
    $region37: #{tpu_custom_call.1} parent=1 // pred_fallthru
      _
    %v35 = vld [vmem:[%s0] sm:$0xf]
    %v36 = vld [vmem:[%s1] sm:$0xff]
    %v37 = vld [vmem:[%s1 + $0x8] sm:$0xff]
    %v38 = vld [vmem:[%s1 + $0x10] sm:$0xff]
    %v39 = vld [vmem:[%s1 + $0x18] sm:$0xff]
    %v40 = vld [vmem:[%s2] sm:$0xff]
    %v41 = vld [vmem:[%s2 + $0x8] sm:$0xff]
    %v42 = vld [vmem:[%s2 + $0x10] sm:$0xff]
    %v43 = vld [vmem:[%s2 + $0x18] sm:$0xff]
    %45 = vset.pattern.permute.xlu0 0
    %46 = vperm.xlu0 %45, %v36
    %v47 = vpop.permute.xlu0 %46
    %50 = vset.pattern.permute.xlu0 0
    %51 = vperm.xlu0 %50, %v37
    %v52 = vpop.permute.xlu0 %51
    %55 = vset.pattern.permute.xlu0 0
    %56 = vperm.xlu0 %55, %v38
    %v57 = vpop.permute.xlu0 %56
    %60 = vset.pattern.permute.xlu0 0
    %61 = vperm.xlu0 %60, %v39
    %v62 = vpop.permute.xlu0 %61
    %v65 = vperm.slane %v35, 0
    %v66 = vperm.slane %v35, 2
    %v69 = vperm.slane %v65, 0
    %v70 = vperm.slane %v66, 0
    %v71 = vmul.f32 %v47, %v69
    %v72 = vmul.f32 %v47, %v70
    %v73 = vmul.f32 %v52, %v69
    %v74 = vmul.f32 %v52, %v70
    %v75 = vmul.f32 %v57, %v69
    %v76 = vmul.f32 %v57, %v70
    %v77 = vmul.f32 %v62, %v69
    %v78 = vmul.f32 %v62, %v70
    %80 = vset.pattern.permute.xlu0 0
    %81 = vperm.xlu0 %80, %v40
    %v82 = vpop.permute.xlu0 %81
    %85 = vset.pattern.permute.xlu0 0
    %86 = vperm.xlu0 %85, %v41
    %v87 = vpop.permute.xlu0 %86
    %90 = vset.pattern.permute.xlu0 0
    %91 = vperm.xlu0 %90, %v42
    %v92 = vpop.permute.xlu0 %91
    %95 = vset.pattern.permute.xlu0 0
    %96 = vperm.xlu0 %95, %v43
    %v97 = vpop.permute.xlu0 %96
    %v99 = vadd.f32 %v71, %v82
    %v100 = vadd.f32 %v72, %v82
    %v101 = vadd.f32 %v73, %v87
    %v102 = vadd.f32 %v74, %v87
    %v103 = vadd.f32 %v75, %v92
    %v104 = vadd.f32 %v76, %v92
    %v105 = vadd.f32 %v77, %v97
    %v106 = vadd.f32 %v78, %v97
    %107 = vset.pattern.permute.xlu0 1
    %108 = vperm.xlu0 %107, %v36
    %v109 = vpop.permute.xlu0 %108
    %111 = vset.pattern.permute.xlu0 1
    %112 = vperm.xlu0 %111, %v37
    %v113 = vpop.permute.xlu0 %112
    %115 = vset.pattern.permute.xlu0 1
    %116 = vperm.xlu0 %115, %v38
    %v117 = vpop.permute.xlu0 %116
    %119 = vset.pattern.permute.xlu0 1
    %120 = vperm.xlu0 %119, %v39
    %v121 = vpop.permute.xlu0 %120
    %v123 = vperm.slane %v35, 1
    %v124 = vperm.slane %v35, 3
    %v127 = vperm.slane %v123, 1
    %v128 = vperm.slane %v124, 1
    %v129 = vmul.f32 %v109, %v127
    %v130 = vmul.f32 %v109, %v128
    %v131 = vmul.f32 %v113, %v127
    %v132 = vmul.f32 %v113, %v128
    %v133 = vmul.f32 %v117, %v127
    %v134 = vmul.f32 %v117, %v128
    %v135 = vmul.f32 %v121, %v127
    %v136 = vmul.f32 %v121, %v128
    %v137 = vadd.f32 %v99, %v129
    %v138 = vadd.f32 %v100, %v130
    %v139 = vadd.f32 %v101, %v131
    %v140 = vadd.f32 %v102, %v132
    %v141 = vadd.f32 %v103, %v133
    %v142 = vadd.f32 %v104, %v134
    %v143 = vadd.f32 %v105, %v135
    %v144 = vadd.f32 %v106, %v136
    %v145 = vtanh.pop %v137
    %v146 = vtanh.pop %v138
    %v147 = vtanh.pop %v139
    %v148 = vtanh.pop %v140
    %v149 = vtanh.pop %v141
    %v150 = vtanh.pop %v142
    %v151 = vtanh.pop %v143
    %v152 = vtanh.pop %v144
    %v153 = vld [vmem:[%s3] sm:$0xff]
    %v154 = vld [vmem:[%s3 + $0x8] sm:$0xff]
    %v155 = vld [vmem:[%s3 + $0x10] sm:$0xff]
    %v156 = vld [vmem:[%s3 + $0x18] sm:$0xff]
    %v157 = vld [vmem:[%s4] sm:$0xff]
    %v158 = vld [vmem:[%s4 + $0x8] sm:$0xff]
    %v159 = vld [vmem:[%s4 + $0x10] sm:$0xff]
    %v160 = vld [vmem:[%s4 + $0x18] sm:$0xff]
    %162 = vset.pattern.permute.xlu0 0
    %163 = vperm.xlu0 %162, %v157
    %v164 = vpop.permute.xlu0 %163
    %167 = vset.pattern.permute.xlu0 0
    %168 = vperm.xlu0 %167, %v158
    %v169 = vpop.permute.xlu0 %168
    %172 = vset.pattern.permute.xlu0 0
    %173 = vperm.xlu0 %172, %v159
    %v174 = vpop.permute.xlu0 %173
    %177 = vset.pattern.permute.xlu0 0
    %178 = vperm.xlu0 %177, %v160
    %v179 = vpop.permute.xlu0 %178
    %vm181 = vcmask 261120
    %v183 = vsel %vm181, %v153, 0
    %v186 = vsel %vm181, %v154, 0
    %v189 = vsel %vm181, %v155, 0
    %v192 = vsel %vm181, %v156, 0
    %194 = vmatpush.msra.mxu0 0.0
    %195 = vmatpush.msra.mxu0 0.0
    %196 = vmatpush.msra.mxu0 0.0
    %197 = vmatpush.msra.mxu0 0.0
    %198 = vmatpush.msra.mxu0 0.0
    %199 = vmatpush.msra.mxu0 0.0
    %200 = vmatpush.msra.mxu0 0.0
    %201 = vmatpush.msra.mxu0 0.0
    %202 = vmatpush.msra.mxu0 0.0
    %203 = vmatpush.msra.mxu0 0.0
    %204 = vmatpush.msra.mxu0 0.0
    %205 = vmatpush.msra.mxu0 0.0
    %206 = vmatpush.msra.mxu0 %v151
    %207 = vmatpush.msra.mxu0 %v149
    %208 = vmatpush.msra.mxu0 %v147
    %209 = vmatpush.msra.mxu0 %v145
    %210 = vmatmul.f32.gmra.mxu0 %v183
    %v211 = vpop.f32.mrf.mxu0
    %v212 = vadd.f32 %v164, %v211
    %213 = vmatmul.f32.gmra.mxu0 %v186
    %v214 = vpop.f32.mrf.mxu0
    %v215 = vadd.f32 %v169, %v214
    %216 = vmatmul.f32.gmra.mxu0 %v189
    %v217 = vpop.f32.mrf.mxu0
    %v218 = vadd.f32 %v174, %v217
    %219 = vmatmul.f32.gmra.mxu0 %v192
    %v220 = vpop.f32.mrf.mxu0
    %v221 = vadd.f32 %v179, %v220
    %222 = vdwg.mxu0
    %223 = vmatpush.msra.mxu0 0.0
    %224 = vmatpush.msra.mxu0 0.0
    %225 = vmatpush.msra.mxu0 0.0
    %226 = vmatpush.msra.mxu0 0.0
    %227 = vmatpush.msra.mxu0 0.0
    %228 = vmatpush.msra.mxu0 0.0
    %229 = vmatpush.msra.mxu0 0.0
    %230 = vmatpush.msra.mxu0 0.0
    %231 = vmatpush.msra.mxu0 0.0
    %232 = vmatpush.msra.mxu0 0.0
    %233 = vmatpush.msra.mxu0 0.0
    %234 = vmatpush.msra.mxu0 0.0
    %235 = vmatpush.msra.mxu0 %v152
    %236 = vmatpush.msra.mxu0 %v150
    %237 = vmatpush.msra.mxu0 %v148
    %238 = vmatpush.msra.mxu0 %v146
    %239 = vmatmul.f32.gmra.mxu0 %v183
    %v240 = vpop.f32.mrf.mxu0
    %v241 = vadd.f32 %v164, %v240
    %242 = vmatmul.f32.gmra.mxu0 %v186
    %v243 = vpop.f32.mrf.mxu0
    %v244 = vadd.f32 %v169, %v243
    %245 = vmatmul.f32.gmra.mxu0 %v189
    %v246 = vpop.f32.mrf.mxu0
    %v247 = vadd.f32 %v174, %v246
    %248 = vmatmul.f32.gmra.mxu0 %v192
    %v249 = vpop.f32.mrf.mxu0
    %v250 = vadd.f32 %v179, %v249
    %251 = vdwg.mxu0
    %v252 = vtanh.pop %v212
    %v253 = vtanh.pop %v241
    %v254 = vtanh.pop %v215
    %v255 = vtanh.pop %v244
    %v256 = vtanh.pop %v218
    %v257 = vtanh.pop %v247
    %v258 = vtanh.pop %v221
    %v259 = vtanh.pop %v250
    %v260 = vld [vmem:[%s5] sm:$0xff]
    %v261 = vld [vmem:[%s5 + $0x8] sm:$0xff]
    %v262 = vld [vmem:[%s5 + $0x10] sm:$0xff]
    %v263 = vld [vmem:[%s5 + $0x18] sm:$0xff]
    %v264 = vld [vmem:[%s6] sm:$0xff]
    %v265 = vld [vmem:[%s6 + $0x8] sm:$0xff]
    %v266 = vld [vmem:[%s6 + $0x10] sm:$0xff]
    %v267 = vld [vmem:[%s6 + $0x18] sm:$0xff]
    %269 = vset.pattern.permute.xlu0 0
    %270 = vperm.xlu0 %269, %v264
    %v271 = vpop.permute.xlu0 %270
    %274 = vset.pattern.permute.xlu0 0
    %275 = vperm.xlu0 %274, %v265
    %v276 = vpop.permute.xlu0 %275
    %279 = vset.pattern.permute.xlu0 0
    %280 = vperm.xlu0 %279, %v266
    %v281 = vpop.permute.xlu0 %280
    %284 = vset.pattern.permute.xlu0 0
    %285 = vperm.xlu0 %284, %v267
    %v286 = vpop.permute.xlu0 %285
    %v289 = vsel %vm181, %v260, 0
    %v292 = vsel %vm181, %v261, 0
    %v295 = vsel %vm181, %v262, 0
    %v298 = vsel %vm181, %v263, 0
    %300 = vmatpush.msra.mxu0 0.0
    %301 = vmatpush.msra.mxu0 0.0
    %302 = vmatpush.msra.mxu0 0.0
    %303 = vmatpush.msra.mxu0 0.0
    %304 = vmatpush.msra.mxu0 0.0
    %305 = vmatpush.msra.mxu0 0.0
    %306 = vmatpush.msra.mxu0 0.0
    %307 = vmatpush.msra.mxu0 0.0
    %308 = vmatpush.msra.mxu0 0.0
    %309 = vmatpush.msra.mxu0 0.0
    %310 = vmatpush.msra.mxu0 0.0
    %311 = vmatpush.msra.mxu0 0.0
    %312 = vmatpush.msra.mxu0 %v258
    %313 = vmatpush.msra.mxu0 %v256
    %314 = vmatpush.msra.mxu0 %v254
    %315 = vmatpush.msra.mxu0 %v252
    %316 = vmatmul.f32.gmra.mxu0 %v289
    %v317 = vpop.f32.mrf.mxu0
    %v318 = vadd.f32 %v271, %v317
    %319 = vmatmul.f32.gmra.mxu0 %v292
    %v320 = vpop.f32.mrf.mxu0
    %v321 = vadd.f32 %v276, %v320
    %322 = vmatmul.f32.gmra.mxu0 %v295
    %v323 = vpop.f32.mrf.mxu0
    %v324 = vadd.f32 %v281, %v323
    %325 = vmatmul.f32.gmra.mxu0 %v298
    %v326 = vpop.f32.mrf.mxu0
    %v327 = vadd.f32 %v286, %v326
    %328 = vdwg.mxu0
    %329 = vmatpush.msra.mxu0 0.0
    %330 = vmatpush.msra.mxu0 0.0
    %331 = vmatpush.msra.mxu0 0.0
    %332 = vmatpush.msra.mxu0 0.0
    %333 = vmatpush.msra.mxu0 0.0
    %334 = vmatpush.msra.mxu0 0.0
    %335 = vmatpush.msra.mxu0 0.0
    %336 = vmatpush.msra.mxu0 0.0
    %337 = vmatpush.msra.mxu0 0.0
    %338 = vmatpush.msra.mxu0 0.0
    %339 = vmatpush.msra.mxu0 0.0
    %340 = vmatpush.msra.mxu0 0.0
    %341 = vmatpush.msra.mxu0 %v259
    %342 = vmatpush.msra.mxu0 %v257
    %343 = vmatpush.msra.mxu0 %v255
    %344 = vmatpush.msra.mxu0 %v253
    %345 = vmatmul.f32.gmra.mxu0 %v289
    %v346 = vpop.f32.mrf.mxu0
    %v347 = vadd.f32 %v271, %v346
    %348 = vmatmul.f32.gmra.mxu0 %v292
    %v349 = vpop.f32.mrf.mxu0
    %v350 = vadd.f32 %v276, %v349
    %351 = vmatmul.f32.gmra.mxu0 %v295
    %v352 = vpop.f32.mrf.mxu0
    %v353 = vadd.f32 %v281, %v352
    %354 = vmatmul.f32.gmra.mxu0 %v298
    %v355 = vpop.f32.mrf.mxu0
    %v356 = vadd.f32 %v286, %v355
    %357 = vdwg.mxu0
    %v358 = vtanh.pop %v318
    %v359 = vtanh.pop %v347
    %v360 = vtanh.pop %v321
    %v361 = vtanh.pop %v350
    %v362 = vtanh.pop %v324
    %v363 = vtanh.pop %v353
    %v364 = vtanh.pop %v327
    %v365 = vtanh.pop %v356
    %v366 = vld [vmem:[%s7] sm:$0xff]
    %v367 = vld [vmem:[%s7 + $0x8] sm:$0xff]
    %v368 = vld [vmem:[%s7 + $0x10] sm:$0xff]
    %v369 = vld [vmem:[%s7 + $0x18] sm:$0xff]
    %v370 = vld [vmem:[#allocation2] sm:$0x1]
    %372 = vset.pattern.permute.xlu0 0
    %373 = vperm.xlu0 %372, %v366
    %v374 = vpop.permute.xlu0 %373
    %377 = vset.pattern.permute.xlu0 0
    %378 = vperm.xlu0 %377, %v367
    %v379 = vpop.permute.xlu0 %378
    %382 = vset.pattern.permute.xlu0 0
    %383 = vperm.xlu0 %382, %v368
    %v384 = vpop.permute.xlu0 %383
    %387 = vset.pattern.permute.xlu0 0
    %388 = vperm.xlu0 %387, %v369
    %v389 = vpop.permute.xlu0 %388
    %v391 = vmul.f32 %v374, %v358
    %v392 = vmul.f32 %v374, %v359
    %v393 = vmul.f32 %v379, %v360
    %v394 = vmul.f32 %v379, %v361
    %v395 = vmul.f32 %v384, %v362
    %v396 = vmul.f32 %v384, %v363
    %v397 = vmul.f32 %v389, %v364
    %v398 = vmul.f32 %v389, %v365
    %v399 = vadd.f32 %v391, %v393
    %v400 = vadd.f32 %v399, %v395
    %v401 = vadd.f32 %v400, %v397
    %v402 = vrot.slane %v401, 4
    %v403 = vadd.f32 %v401, %v402
    %v404 = vrot.slane %v403, 2
    %v405 = vadd.f32 %v403, %v404
    %v406 = vrot.slane %v405, 1
    %v407 = vadd.f32 %v405, %v406
    %v408 = vadd.f32 %v392, %v394
    %v409 = vadd.f32 %v408, %v396
    %v410 = vadd.f32 %v409, %v398
    %v411 = vrot.slane %v410, 4
    %v412 = vadd.f32 %v410, %v411
    %v413 = vrot.slane %v412, 2
    %v414 = vadd.f32 %v412, %v413
    %v415 = vrot.slane %v414, 1
    %v416 = vadd.f32 %v414, %v415
    %418 = vset.pattern.permute.xlu0 0
    %419 = vperm.xlu0 %418, %v370
    %v420 = vpop.permute.xlu0 %419
    %v422 = vperm.slane %v420, 0
    %v423 = vadd.f32 %v407, %v422
    %v424 = vadd.f32 %v416, %v422
    %v427 = vrot.slane %v424, 7
    %vm428 = vcmask 1040384
    %v429 = vsel %vm428, %v423, %v427
    %v431 = vlaneseq
    %vm432 = vcmp.ge.s32.totalorder %v431, 0
    %vm433 = vcmp.lt.s32.totalorder %v431, 256
    %vm434 = vmand %vm432, %vm433
    %435 = vst.msk [vmem:[#allocation3] sm:$0x3] %vm434, %v429
    // Predicated region
    $region38: #{tpu_custom_call.1} parent=1 // pred_check
      _
    $region39: #{tpu_custom_call.1} parent=1 // pred_check_branch
      %437 = sbr.rel (0) target = $region41
    $region40: #{tpu_custom_call.1} parent=1 // pred_region
      %439 = vsyncadd [#allocation4], 0
      %s441 = sshll.u32 [#allocation3], 4
      %s442 = int_to_ptr.vmem [resolvable:$true] %s441
      %s443 = sshll.u32 %s9, 4
      %s444 = int_to_ptr.hbm [resolvable:$true] %s443
      %446 = dma.vmem_to_hbm [thread:$0]  %s442, 32, %s444, [#allocation4]
    $region41: #{tpu_custom_call.1} parent=1 // pred_fallthru
      _
    // Predicated region
    $region42: #{tpu_custom_call.1} parent=1 // pred_check
      _
    $region43: #{tpu_custom_call.1} parent=1 // pred_check_branch
      %448 = sbr.rel (0) target = $region45
    $region44: #{tpu_custom_call.1} parent=1 // pred_region
      %450 = dma.done [#allocation4], 32
    $region45: #{tpu_custom_call.1} parent=1 // pred_fallthru
      _
    %451 = vsyncpa [#allocation4], 1

</llo_original>
